<compile_context>
chip_gen: v6e
topology: v6e:2x2x1
jax: 0.10.0
libtpu: 0.0.40
codegen_flags: <defaults>
</compile_context>

<pallas_src>
import math

import jax
import jax.numpy as jnp
from jax.experimental import pallas as pl
from jax.experimental.pallas import tpu as pltpu

# ---------------- configuration (small, consistent with the module) ---------
BATCH = 2          # batch size
NUM_RX_ANT = 4     # R: receive antennas
NUM_LAYERS = 2     # S: transmit layers (num_tx = 1, non-codebook precoding)
NUM_SYM = 14       # OFDM symbols per slot
NUM_SC = 64        # subcarriers
NUM_BITS = 2       # QPSK (num_bits_per_symbol)

LANES = 128        # vreg lanes

_QPSK_SCALE = 2.0 * math.sqrt(2.0)   # max-log QPSK LLR scale (points +-1/sqrt2)
_NO_MIN = 1e-10                      # guards the noise-free (no == 0) corner


# ----------------------------- Pallas kernel --------------------------------
def lmmse_qpsk_kernel(no_ref, hr_ref, hi_ref, yr_ref, yi_ref, llr_ref):
    """Per-RE LMMSE equalisation + max-log QPSK LLRs, S = 2 streams.

    no_ref : SMEM (1,)                  noise variance
    hr_ref : VMEM [S, R, NR, 128]       Re(channel)
    hi_ref : VMEM [S, R, NR, 128]       Im(channel)
    yr_ref : VMEM [R, NR, 128]          Re(rx signal)
    yi_ref : VMEM [R, NR, 128]          Im(rx signal)
    llr_ref: VMEM [S*NUM_BITS, NR, 128]
    Each (NR, 128) slab is a stack of (8,128) vregs over resource elements.
    """
    no = no_ref[0]
    num_rx = hr_ref.shape[1]

    # A = H^H H (2x2 Hermitian per RE) and z = H^H y, accumulated with an
    # unrolled loop over rx antennas: R is never a vreg axis, so these are
    # pure full-vreg VPU adds (no XLU) with a bounded vreg live range
    # (~6 input + 8 accumulator vregs per 8-row chunk).
    a11 = a22 = a12r = a12i = None
    z1r = z1i = z2r = z2i = None
    for r in range(num_rx):
        h0r = hr_ref[0, r]
        h0i = hi_ref[0, r]
        h1r = hr_ref[1, r]
        h1i = hi_ref[1, r]
        yr = yr_ref[r]
        yi = yi_ref[r]
        if r == 0:
            a11 = h0r * h0r + h0i * h0i
            a22 = h1r * h1r + h1i * h1i
            a12r = h0r * h1r + h0i * h1i
            a12i = h0r * h1i - h0i * h1r
            z1r = h0r * yr + h0i * yi
            z1i = h0r * yi - h0i * yr
            z2r = h1r * yr + h1i * yi
            z2i = h1r * yi - h1i * yr
        else:
            a11 += h0r * h0r + h0i * h0i
            a22 += h1r * h1r + h1i * h1i
            a12r += h0r * h1r + h0i * h1i
            a12i += h0r * h1i - h0i * h1r
            z1r += h0r * yr + h0i * yi
            z1i += h0r * yi - h0i * yr
            z2r += h1r * yr + h1i * yi
            z2i += h1r * yi - h1i * yr
    a11 = a11 + no
    a22 = a22 + no

    # Unbiased-LMMSE max-log QPSK LLRs with det / gain / no_eff cancelled:
    #   llr(stream0) = SCALE * (a22*z1 - a12*z2)       / (no * a22)
    #   llr(stream1) = SCALE * (a11*z2 - conj(a12)*z1) / (no * a11)
    # Kernel is HBM-bound, so exact reciprocals are free (and keep LLR scaling
    # bit-accurate for a downstream LDPC decoder).
    c1 = _QPSK_SCALE * pl.reciprocal(no * a22, approx=False)
    c2 = _QPSK_SCALE * pl.reciprocal(no * a11, approx=False)

    llr_ref[0] = (a22 * z1r - (a12r * z2r - a12i * z2i)) * c1   # s0, bit0 (re)
    llr_ref[1] = (a22 * z1i - (a12r * z2i + a12i * z2r)) * c1   # s0, bit1 (im)
    llr_ref[2] = (a11 * z2r - (a12r * z1r + a12i * z1i)) * c2   # s1, bit0 (re)
    llr_ref[3] = (a11 * z2i - (a12r * z1i - a12i * z1r)) * c2   # s1, bit1 (im)


# ------------------------------ wrappers -------------------------------------
def lmmse_detect_pallas(hr, hi, yr, yi, no):
    """hr/hi: [S,R,NR,128] f32, yr/yi: [R,NR,128] f32, no: (1,) f32
    -> llr [S*NUM_BITS, NR, 128] f32."""
    S, R, nrows, lanes = hr.shape
    assert lanes == LANES and S == NUM_LAYERS and R == NUM_RX_ANT
    n_re = nrows * lanes

    # Single full-extent block (no grid): the whole problem stays resident in
    # VMEM (~14 KiB per row-of-128-REs, i.e. comfortable well beyond 10^5 REs
    # even on v7x's 64 MiB VMEM); full-extent blocks are exempt from the
    # (8,128) divisibility rule, so nrows=14 needs no padding, and one
    # invocation avoids all per-grid-step overhead.
    # TODO(synk): for very large slots (>~1M REs) tile the NR axis with a
    #             leading tiled dimension and block_rows ~512 instead.
    cost = pl.CostEstimate(
        flops=150 * n_re,
        transcendentals=2 * n_re,
        bytes_accessed=(hr.size + hi.size + yr.size + yi.size
                        + S * NUM_BITS * n_re) * 4,
    )
    vmem = pl.BlockSpec(memory_space=pltpu.MemorySpace.VMEM)
    return pl.pallas_call(
        lmmse_qpsk_kernel,
        out_shape=jax.ShapeDtypeStruct((S * NUM_BITS, nrows, LANES), jnp.float32),
        in_specs=[
            pl.BlockSpec(memory_space=pltpu.MemorySpace.SMEM),   # no (scalar)
            vmem, vmem, vmem, vmem,                              # hr, hi, yr, yi
        ],
        out_specs=vmem,
        cost_estimate=cost,
    )(no, hr, hi, yr, yi)


def _detect_flat(hr, hi, yr, yi, no_scalar):
    """hr/hi: [S,R,N] f32, yr/yi: [R,N] f32, no: () -> llr [S*NUM_BITS, N]."""
    S, R, N = hr.shape
    n_pad = -(-N // LANES) * LANES
    pad = n_pad - N
    if pad:
        # Only needed when N is not a multiple of 128 (not the case here).
        # Zero-padded REs give a11 = a22 = no, z = 0 -> llr = 0 (finite thanks
        # to the _NO_MIN clamp); they are sliced off below.
        hr = jnp.pad(hr, ((0, 0), (0, 0), (0, pad)))
        hi = jnp.pad(hi, ((0, 0), (0, 0), (0, pad)))
        yr = jnp.pad(yr, ((0, 0), (0, pad)))
        yi = jnp.pad(yi, ((0, 0), (0, pad)))
    nrows = n_pad // LANES
    hr = hr.reshape(S, R, nrows, LANES)
    hi = hi.reshape(S, R, nrows, LANES)
    yr = yr.reshape(R, nrows, LANES)
    yi = yi.reshape(R, nrows, LANES)
    no_arr = jnp.reshape(
        jnp.maximum(jnp.asarray(no_scalar, jnp.float32), _NO_MIN), (1,))
    llr = lmmse_detect_pallas(hr, hi, yr, yi, no_arr)   # [S*BITS, NR, 128]
    return llr.reshape(S * NUM_BITS, n_pad)[:, :N]


@jax.jit
def pusch_receiver_forward(y, h, no):
    """PUSCHReceiver.forward for the perfect-CSI / freq-domain configuration.

    y  : [B, 1, R, T, F] complex64          received resource grid
    h  : [B, 1, R, 1, S, T, F] complex64    perfect channel knowledge
    no : () float32                         noise variance
    Returns (b_hat [B,1,T*F*S*NUM_BITS] f32 hard bits, tb_crc_status, llr).
    """
    B, _, R, _, S, T, F = h.shape
    N = B * T * F

    # ---- reshape to kernel layout (RE-last [S,R,N]; jit lets XLA fuse it) --
    h_k = jnp.transpose(h[:, 0, :, 0, :, :, :], (2, 1, 0, 3, 4)).reshape(S, R, N)
    y_k = jnp.transpose(y[:, 0, :, :, :], (1, 0, 2, 3)).reshape(R, N)

    hr = jnp.real(h_k).astype(jnp.float32)
    hi = jnp.imag(h_k).astype(jnp.float32)
    yr = jnp.real(y_k).astype(jnp.float32)
    yi = jnp.imag(y_k).astype(jnp.float32)

    # ---- hot path: per-RE LMMSE + max-log QPSK demapping (Pallas) ----------
    llr = _detect_flat(hr, hi, yr, yi, no)                  # [S*BITS, N]

    # ---- LayerDemapper: regroup LLRs per RE, layers interleaved ------------
    llr = llr.reshape(S, NUM_BITS, B, T, F)                 # [S,b,B,T,F]
    llr = jnp.transpose(llr, (2, 3, 4, 0, 1))               # [B,T,F,S,b]
    llr = llr.reshape(B, 1, T * F * S * NUM_BITS)           # num_tx = 1

    # ---- TBDecoder stand-in: hard decision ---------------------------------
    b_hat = (llr > 0.0).astype(jnp.float32)
    tb_crc_status = jnp.zeros((B, 1), dtype=jnp.bool_)
    return b_hat, tb_crc_status, llr


# ------------------------------ reference ------------------------------------
def _ref_llr(hr, hi, yr, yi, no):
    """Pure-JAX reference: full (un-simplified) unbiased LMMSE + max-log QPSK."""
    h0r, h0i, h1r, h1i = hr[0], hi[0], hr[1], hi[1]
    a11 = jnp.sum(h0r * h0r + h0i * h0i, axis=0, keepdims=True) + no
    a22 = jnp.sum(h1r * h1r + h1i * h1i, axis=0, keepdims=True) + no
    a12r = jnp.sum(h0r * h1r + h0i * h1i, axis=0, keepdims=True)
    a12i = jnp.sum(h0r * h1i - h0i * h1r, axis=0, keepdims=True)
    z1r = jnp.sum(h0r * yr + h0i * yi, axis=0, keepdims=True)
    z1i = jnp.sum(h0r * yi - h0i * yr, axis=0, keepdims=True)
    z2r = jnp.sum(h1r * yr + h1i * yi, axis=0, keepdims=True)
    z2i = jnp.sum(h1r * yi - h1i * yr, axis=0, keepdims=True)
    det = a11 * a22 - (a12r * a12r + a12i * a12i)
    inv_det = 1.0 / det
    x1r = (a22 * z1r - (a12r * z2r - a12i * z2i)) * inv_det
    x1i = (a22 * z1i - (a12r * z2i + a12i * z2r)) * inv_det
    x2r = (a11 * z2r - (a12r * z1r + a12i * z1i)) * inv_det
    x2i = (a11 * z2i - (a12r * z1i - a12i * z1r)) * inv_det
    g1 = 1.0 - no * a22 * inv_det
    g2 = 1.0 - no * a11 * inv_det
    s1 = _QPSK_SCALE / (g1 * ((1.0 - g1) / g1))
    s2 = _QPSK_SCALE / (g2 * ((1.0 - g2) / g2))
    return jnp.concatenate([x1r * s1, x1i * s1, x2r * s2, x2i * s2], axis=0)


# -------------------------------- main ---------------------------------------
if __name__ == "__main__":
    key = jax.random.PRNGKey(0)
    k1, k2, k3 = jax.random.split(key, 3)

    B, R, S, T, F = BATCH, NUM_RX_ANT, NUM_LAYERS, NUM_SYM, NUM_SC

    # Perfect-CSI channel: [B, num_rx=1, R, num_tx=1, S, T, F] complex64
    h = (jax.random.normal(k1, (B, 1, R, 1, S, T, F), jnp.float32)
         + 1j * jax.random.normal(k2, (B, 1, R, 1, S, T, F), jnp.float32)
         ).astype(jnp.complex64) / jnp.sqrt(2.0).astype(jnp.float32)

    # Transmitted QPSK symbols per layer and noise
    bits = jax.random.bernoulli(k3, 0.5, (B, 1, 1, S, T, F, NUM_BITS))
    x_sym = ((2.0 * bits[..., 0] - 1.0) + 1j * (2.0 * bits[..., 1] - 1.0)
             ).astype(jnp.complex64) / jnp.sqrt(2.0).astype(jnp.complex64)
    no = jnp.float32(0.1)
    kn1, kn2 = jax.random.split(jax.random.PRNGKey(7))
    noise = (jax.random.normal(kn1, (B, 1, R, T, F), jnp.float32)
             + 1j * jax.random.normal(kn2, (B, 1, R, T, F), jnp.float32)
             ).astype(jnp.complex64) * jnp.sqrt(no / 2.0).astype(jnp.complex64)

    # y[b,0,r,t,f] = sum_s h[b,0,r,0,s,t,f] * x[b,0,0,s,t,f] + n
    y = jnp.einsum("brstf,bstf->brtf",
                   h[:, 0, :, 0, :, :, :],
                   x_sym[:, 0, 0, :, :, :]).reshape(B, 1, R, T, F) + noise
    y = y.astype(jnp.complex64)

    b_hat, tb_crc_status, llr = pusch_receiver_forward(y, h, no)
    b_hat = jax.block_until_ready(b_hat)

    # sanity check of the Pallas kernel vs. a pure-JAX (un-simplified) reference
    N = B * T * F
    h_k = jnp.transpose(h[:, 0, :, 0, :, :, :], (2, 1, 0, 3, 4)).reshape(S, R, N)
    y_k = jnp.transpose(y[:, 0, :, :, :], (1, 0, 2, 3)).reshape(R, N)
    hr = jnp.real(h_k).astype(jnp.float32)
    hi = jnp.imag(h_k).astype(jnp.float32)
    yr = jnp.real(y_k).astype(jnp.float32)
    yi = jnp.imag(y_k).astype(jnp.float32)
    llr_ref = _ref_llr(hr, hi, yr, yi, no)
    llr_pal = _detect_flat(hr, hi, yr, yi, no)
    llr_pal = jax.block_until_ready(llr_pal)
    assert jnp.allclose(llr_pal, llr_ref, rtol=2e-3, atol=2e-3), "mismatch"
    assert b_hat.shape == (B, 1, T * F * S * NUM_BITS)
    assert bool(jnp.all(jnp.isfinite(llr)))

    print("KERNEL_OK")
</pallas_src>

<mosaic_0001>
module attributes {stable_mosaic.version = 11 : i64} {
  func.func @lmmse_qpsk_kernel(%arg0: memref<1xf32, #tpu.memory_space<smem>>, %arg1: memref<2x4x14x128xf32, #tpu.memory_space<vmem>>, %arg2: memref<2x4x14x128xf32, #tpu.memory_space<vmem>>, %arg3: memref<4x14x128xf32, #tpu.memory_space<vmem>>, %arg4: memref<4x14x128xf32, #tpu.memory_space<vmem>>, %arg5: memref<4x14x128xf32, #tpu.memory_space<vmem>>) attributes {dimension_semantics = [], scalar_prefetch = 0 : i64, scratch_operands = 0 : i64, tpu.core_type = #tpu.core_type<tc>} {
    %c0 = arith.constant 0 : index
    %0 = memref.load %arg0[%c0] : memref<1xf32, #tpu.memory_space<smem>>
    %c0_0 = arith.constant 0 : index
    %c0_1 = arith.constant 0 : index
    %c0_2 = arith.constant 0 : index
    %c0_3 = arith.constant 0 : index
    %1 = vector.load %arg1[%c0_0, %c0_1, %c0_2, %c0_3] : memref<2x4x14x128xf32, #tpu.memory_space<vmem>>, vector<1x1x14x128xf32>
    %2 = vector.shape_cast %1 : vector<1x1x14x128xf32> to vector<14x128xf32>
    %c0_4 = arith.constant 0 : index
    %c0_5 = arith.constant 0 : index
    %c0_6 = arith.constant 0 : index
    %c0_7 = arith.constant 0 : index
    %3 = vector.load %arg2[%c0_4, %c0_5, %c0_6, %c0_7] : memref<2x4x14x128xf32, #tpu.memory_space<vmem>>, vector<1x1x14x128xf32>
    %4 = vector.shape_cast %3 : vector<1x1x14x128xf32> to vector<14x128xf32>
    %c1 = arith.constant 1 : index
    %c0_8 = arith.constant 0 : index
    %c0_9 = arith.constant 0 : index
    %c0_10 = arith.constant 0 : index
    %5 = vector.load %arg1[%c1, %c0_8, %c0_9, %c0_10] : memref<2x4x14x128xf32, #tpu.memory_space<vmem>>, vector<1x1x14x128xf32>
    %6 = vector.shape_cast %5 : vector<1x1x14x128xf32> to vector<14x128xf32>
    %c1_11 = arith.constant 1 : index
    %c0_12 = arith.constant 0 : index
    %c0_13 = arith.constant 0 : index
    %c0_14 = arith.constant 0 : index
    %7 = vector.load %arg2[%c1_11, %c0_12, %c0_13, %c0_14] : memref<2x4x14x128xf32, #tpu.memory_space<vmem>>, vector<1x1x14x128xf32>
    %8 = vector.shape_cast %7 : vector<1x1x14x128xf32> to vector<14x128xf32>
    %c0_15 = arith.constant 0 : index
    %c0_16 = arith.constant 0 : index
    %c0_17 = arith.constant 0 : index
    %9 = vector.load %arg3[%c0_15, %c0_16, %c0_17] : memref<4x14x128xf32, #tpu.memory_space<vmem>>, vector<1x14x128xf32>
    %10 = vector.shape_cast %9 : vector<1x14x128xf32> to vector<14x128xf32>
    %c0_18 = arith.constant 0 : index
    %c0_19 = arith.constant 0 : index
    %c0_20 = arith.constant 0 : index
    %11 = vector.load %arg4[%c0_18, %c0_19, %c0_20] : memref<4x14x128xf32, #tpu.memory_space<vmem>>, vector<1x14x128xf32>
    %12 = vector.shape_cast %11 : vector<1x14x128xf32> to vector<14x128xf32>
    %13 = arith.mulf %2, %2 : vector<14x128xf32>
    %14 = arith.mulf %4, %4 : vector<14x128xf32>
    %15 = arith.addf %13, %14 : vector<14x128xf32>
    %16 = arith.mulf %6, %6 : vector<14x128xf32>
    %17 = arith.mulf %8, %8 : vector<14x128xf32>
    %18 = arith.addf %16, %17 : vector<14x128xf32>
    %19 = arith.mulf %2, %6 : vector<14x128xf32>
    %20 = arith.mulf %4, %8 : vector<14x128xf32>
    %21 = arith.addf %19, %20 : vector<14x128xf32>
    %22 = arith.mulf %2, %8 : vector<14x128xf32>
    %23 = arith.mulf %4, %6 : vector<14x128xf32>
    %24 = arith.subf %22, %23 : vector<14x128xf32>
    %25 = arith.mulf %2, %10 : vector<14x128xf32>
    %26 = arith.mulf %4, %12 : vector<14x128xf32>
    %27 = arith.addf %25, %26 : vector<14x128xf32>
    %28 = arith.mulf %2, %12 : vector<14x128xf32>
    %29 = arith.mulf %4, %10 : vector<14x128xf32>
    %30 = arith.subf %28, %29 : vector<14x128xf32>
    %31 = arith.mulf %6, %10 : vector<14x128xf32>
    %32 = arith.mulf %8, %12 : vector<14x128xf32>
    %33 = arith.addf %31, %32 : vector<14x128xf32>
    %34 = arith.mulf %6, %12 : vector<14x128xf32>
    %35 = arith.mulf %8, %10 : vector<14x128xf32>
    %36 = arith.subf %34, %35 : vector<14x128xf32>
    %c0_21 = arith.constant 0 : index
    %c1_22 = arith.constant 1 : index
    %c0_23 = arith.constant 0 : index
    %c0_24 = arith.constant 0 : index
    %37 = vector.load %arg1[%c0_21, %c1_22, %c0_23, %c0_24] : memref<2x4x14x128xf32, #tpu.memory_space<vmem>>, vector<1x1x14x128xf32>
    %38 = vector.shape_cast %37 : vector<1x1x14x128xf32> to vector<14x128xf32>
    %c0_25 = arith.constant 0 : index
    %c1_26 = arith.constant 1 : index
    %c0_27 = arith.constant 0 : index
    %c0_28 = arith.constant 0 : index
    %39 = vector.load %arg2[%c0_25, %c1_26, %c0_27, %c0_28] : memref<2x4x14x128xf32, #tpu.memory_space<vmem>>, vector<1x1x14x128xf32>
    %40 = vector.shape_cast %39 : vector<1x1x14x128xf32> to vector<14x128xf32>
    %c1_29 = arith.constant 1 : index
    %c1_30 = arith.constant 1 : index
    %c0_31 = arith.constant 0 : index
    %c0_32 = arith.constant 0 : index
    %41 = vector.load %arg1[%c1_29, %c1_30, %c0_31, %c0_32] : memref<2x4x14x128xf32, #tpu.memory_space<vmem>>, vector<1x1x14x128xf32>
    %42 = vector.shape_cast %41 : vector<1x1x14x128xf32> to vector<14x128xf32>
    %c1_33 = arith.constant 1 : index
    %c1_34 = arith.constant 1 : index
    %c0_35 = arith.constant 0 : index
    %c0_36 = arith.constant 0 : index
    %43 = vector.load %arg2[%c1_33, %c1_34, %c0_35, %c0_36] : memref<2x4x14x128xf32, #tpu.memory_space<vmem>>, vector<1x1x14x128xf32>
    %44 = vector.shape_cast %43 : vector<1x1x14x128xf32> to vector<14x128xf32>
    %c1_37 = arith.constant 1 : index
    %c0_38 = arith.constant 0 : index
    %c0_39 = arith.constant 0 : index
    %45 = vector.load %arg3[%c1_37, %c0_38, %c0_39] : memref<4x14x128xf32, #tpu.memory_space<vmem>>, vector<1x14x128xf32>
    %46 = vector.shape_cast %45 : vector<1x14x128xf32> to vector<14x128xf32>
    %c1_40 = arith.constant 1 : index
    %c0_41 = arith.constant 0 : index
    %c0_42 = arith.constant 0 : index
    %47 = vector.load %arg4[%c1_40, %c0_41, %c0_42] : memref<4x14x128xf32, #tpu.memory_space<vmem>>, vector<1x14x128xf32>
    %48 = vector.shape_cast %47 : vector<1x14x128xf32> to vector<14x128xf32>
    %49 = arith.mulf %38, %38 : vector<14x128xf32>
    %50 = arith.mulf %40, %40 : vector<14x128xf32>
    %51 = arith.addf %49, %50 : vector<14x128xf32>
    %52 = arith.addf %15, %51 : vector<14x128xf32>
    %53 = arith.mulf %42, %42 : vector<14x128xf32>
    %54 = arith.mulf %44, %44 : vector<14x128xf32>
    %55 = arith.addf %53, %54 : vector<14x128xf32>
    %56 = arith.addf %18, %55 : vector<14x128xf32>
    %57 = arith.mulf %38, %42 : vector<14x128xf32>
    %58 = arith.mulf %40, %44 : vector<14x128xf32>
    %59 = arith.addf %57, %58 : vector<14x128xf32>
    %60 = arith.addf %21, %59 : vector<14x128xf32>
    %61 = arith.mulf %38, %44 : vector<14x128xf32>
    %62 = arith.mulf %40, %42 : vector<14x128xf32>
    %63 = arith.subf %61, %62 : vector<14x128xf32>
    %64 = arith.addf %24, %63 : vector<14x128xf32>
    %65 = arith.mulf %38, %46 : vector<14x128xf32>
    %66 = arith.mulf %40, %48 : vector<14x128xf32>
    %67 = arith.addf %65, %66 : vector<14x128xf32>
    %68 = arith.addf %27, %67 : vector<14x128xf32>
    %69 = arith.mulf %38, %48 : vector<14x128xf32>
    %70 = arith.mulf %40, %46 : vector<14x128xf32>
    %71 = arith.subf %69, %70 : vector<14x128xf32>
    %72 = arith.addf %30, %71 : vector<14x128xf32>
    %73 = arith.mulf %42, %46 : vector<14x128xf32>
    %74 = arith.mulf %44, %48 : vector<14x128xf32>
    %75 = arith.addf %73, %74 : vector<14x128xf32>
    %76 = arith.addf %33, %75 : vector<14x128xf32>
    %77 = arith.mulf %42, %48 : vector<14x128xf32>
    %78 = arith.mulf %44, %46 : vector<14x128xf32>
    %79 = arith.subf %77, %78 : vector<14x128xf32>
    %80 = arith.addf %36, %79 : vector<14x128xf32>
    %c0_43 = arith.constant 0 : index
    %c2 = arith.constant 2 : index
    %c0_44 = arith.constant 0 : index
    %c0_45 = arith.constant 0 : index
    %81 = vector.load %arg1[%c0_43, %c2, %c0_44, %c0_45] : memref<2x4x14x128xf32, #tpu.memory_space<vmem>>, vector<1x1x14x128xf32>
    %82 = vector.shape_cast %81 : vector<1x1x14x128xf32> to vector<14x128xf32>
    %c0_46 = arith.constant 0 : index
    %c2_47 = arith.constant 2 : index
    %c0_48 = arith.constant 0 : index
    %c0_49 = arith.constant 0 : index
    %83 = vector.load %arg2[%c0_46, %c2_47, %c0_48, %c0_49] : memref<2x4x14x128xf32, #tpu.memory_space<vmem>>, vector<1x1x14x128xf32>
    %84 = vector.shape_cast %83 : vector<1x1x14x128xf32> to vector<14x128xf32>
    %c1_50 = arith.constant 1 : index
    %c2_51 = arith.constant 2 : index
    %c0_52 = arith.constant 0 : index
    %c0_53 = arith.constant 0 : index
    %85 = vector.load %arg1[%c1_50, %c2_51, %c0_52, %c0_53] : memref<2x4x14x128xf32, #tpu.memory_space<vmem>>, vector<1x1x14x128xf32>
    %86 = vector.shape_cast %85 : vector<1x1x14x128xf32> to vector<14x128xf32>
    %c1_54 = arith.constant 1 : index
    %c2_55 = arith.constant 2 : index
    %c0_56 = arith.constant 0 : index
    %c0_57 = arith.constant 0 : index
    %87 = vector.load %arg2[%c1_54, %c2_55, %c0_56, %c0_57] : memref<2x4x14x128xf32, #tpu.memory_space<vmem>>, vector<1x1x14x128xf32>
    %88 = vector.shape_cast %87 : vector<1x1x14x128xf32> to vector<14x128xf32>
    %c2_58 = arith.constant 2 : index
    %c0_59 = arith.constant 0 : index
    %c0_60 = arith.constant 0 : index
    %89 = vector.load %arg3[%c2_58, %c0_59, %c0_60] : memref<4x14x128xf32, #tpu.memory_space<vmem>>, vector<1x14x128xf32>
    %90 = vector.shape_cast %89 : vector<1x14x128xf32> to vector<14x128xf32>
    %c2_61 = arith.constant 2 : index
    %c0_62 = arith.constant 0 : index
    %c0_63 = arith.constant 0 : index
    %91 = vector.load %arg4[%c2_61, %c0_62, %c0_63] : memref<4x14x128xf32, #tpu.memory_space<vmem>>, vector<1x14x128xf32>
    %92 = vector.shape_cast %91 : vector<1x14x128xf32> to vector<14x128xf32>
    %93 = arith.mulf %82, %82 : vector<14x128xf32>
    %94 = arith.mulf %84, %84 : vector<14x128xf32>
    %95 = arith.addf %93, %94 : vector<14x128xf32>
    %96 = arith.addf %52, %95 : vector<14x128xf32>
    %97 = arith.mulf %86, %86 : vector<14x128xf32>
    %98 = arith.mulf %88, %88 : vector<14x128xf32>
    %99 = arith.addf %97, %98 : vector<14x128xf32>
    %100 = arith.addf %56, %99 : vector<14x128xf32>
    %101 = arith.mulf %82, %86 : vector<14x128xf32>
    %102 = arith.mulf %84, %88 : vector<14x128xf32>
    %103 = arith.addf %101, %102 : vector<14x128xf32>
    %104 = arith.addf %60, %103 : vector<14x128xf32>
    %105 = arith.mulf %82, %88 : vector<14x128xf32>
    %106 = arith.mulf %84, %86 : vector<14x128xf32>
    %107 = arith.subf %105, %106 : vector<14x128xf32>
    %108 = arith.addf %64, %107 : vector<14x128xf32>
    %109 = arith.mulf %82, %90 : vector<14x128xf32>
    %110 = arith.mulf %84, %92 : vector<14x128xf32>
    %111 = arith.addf %109, %110 : vector<14x128xf32>
    %112 = arith.addf %68, %111 : vector<14x128xf32>
    %113 = arith.mulf %82, %92 : vector<14x128xf32>
    %114 = arith.mulf %84, %90 : vector<14x128xf32>
    %115 = arith.subf %113, %114 : vector<14x128xf32>
    %116 = arith.addf %72, %115 : vector<14x128xf32>
    %117 = arith.mulf %86, %90 : vector<14x128xf32>
    %118 = arith.mulf %88, %92 : vector<14x128xf32>
    %119 = arith.addf %117, %118 : vector<14x128xf32>
    %120 = arith.addf %76, %119 : vector<14x128xf32>
    %121 = arith.mulf %86, %92 : vector<14x128xf32>
    %122 = arith.mulf %88, %90 : vector<14x128xf32>
    %123 = arith.subf %121, %122 : vector<14x128xf32>
    %124 = arith.addf %80, %123 : vector<14x128xf32>
    %c0_64 = arith.constant 0 : index
    %c3 = arith.constant 3 : index
    %c0_65 = arith.constant 0 : index
    %c0_66 = arith.constant 0 : index
    %125 = vector.load %arg1[%c0_64, %c3, %c0_65, %c0_66] : memref<2x4x14x128xf32, #tpu.memory_space<vmem>>, vector<1x1x14x128xf32>
    %126 = vector.shape_cast %125 : vector<1x1x14x128xf32> to vector<14x128xf32>
    %c0_67 = arith.constant 0 : index
    %c3_68 = arith.constant 3 : index
    %c0_69 = arith.constant 0 : index
    %c0_70 = arith.constant 0 : index
    %127 = vector.load %arg2[%c0_67, %c3_68, %c0_69, %c0_70] : memref<2x4x14x128xf32, #tpu.memory_space<vmem>>, vector<1x1x14x128xf32>
    %128 = vector.shape_cast %127 : vector<1x1x14x128xf32> to vector<14x128xf32>
    %c1_71 = arith.constant 1 : index
    %c3_72 = arith.constant 3 : index
    %c0_73 = arith.constant 0 : index
    %c0_74 = arith.constant 0 : index
    %129 = vector.load %arg1[%c1_71, %c3_72, %c0_73, %c0_74] : memref<2x4x14x128xf32, #tpu.memory_space<vmem>>, vector<1x1x14x128xf32>
    %130 = vector.shape_cast %129 : vector<1x1x14x128xf32> to vector<14x128xf32>
    %c1_75 = arith.constant 1 : index
    %c3_76 = arith.constant 3 : index
    %c0_77 = arith.constant 0 : index
    %c0_78 = arith.constant 0 : index
    %131 = vector.load %arg2[%c1_75, %c3_76, %c0_77, %c0_78] : memref<2x4x14x128xf32, #tpu.memory_space<vmem>>, vector<1x1x14x128xf32>
    %132 = vector.shape_cast %131 : vector<1x1x14x128xf32> to vector<14x128xf32>
    %c3_79 = arith.constant 3 : index
    %c0_80 = arith.constant 0 : index
    %c0_81 = arith.constant 0 : index
    %133 = vector.load %arg3[%c3_79, %c0_80, %c0_81] : memref<4x14x128xf32, #tpu.memory_space<vmem>>, vector<1x14x128xf32>
    %134 = vector.shape_cast %133 : vector<1x14x128xf32> to vector<14x128xf32>
    %c3_82 = arith.constant 3 : index
    %c0_83 = arith.constant 0 : index
    %c0_84 = arith.constant 0 : index
    %135 = vector.load %arg4[%c3_82, %c0_83, %c0_84] : memref<4x14x128xf32, #tpu.memory_space<vmem>>, vector<1x14x128xf32>
    %136 = vector.shape_cast %135 : vector<1x14x128xf32> to vector<14x128xf32>
    %137 = arith.mulf %126, %126 : vector<14x128xf32>
    %138 = arith.mulf %128, %128 : vector<14x128xf32>
    %139 = arith.addf %137, %138 : vector<14x128xf32>
    %140 = arith.addf %96, %139 : vector<14x128xf32>
    %141 = arith.mulf %130, %130 : vector<14x128xf32>
    %142 = arith.mulf %132, %132 : vector<14x128xf32>
    %143 = arith.addf %141, %142 : vector<14x128xf32>
    %144 = arith.addf %100, %143 : vector<14x128xf32>
    %145 = arith.mulf %126, %130 : vector<14x128xf32>
    %146 = arith.mulf %128, %132 : vector<14x128xf32>
    %147 = arith.addf %145, %146 : vector<14x128xf32>
    %148 = arith.addf %104, %147 : vector<14x128xf32>
    %149 = arith.mulf %126, %132 : vector<14x128xf32>
    %150 = arith.mulf %128, %130 : vector<14x128xf32>
    %151 = arith.subf %149, %150 : vector<14x128xf32>
    %152 = arith.addf %108, %151 : vector<14x128xf32>
    %153 = arith.mulf %126, %134 : vector<14x128xf32>
    %154 = arith.mulf %128, %136 : vector<14x128xf32>
    %155 = arith.addf %153, %154 : vector<14x128xf32>
    %156 = arith.addf %112, %155 : vector<14x128xf32>
    %157 = arith.mulf %126, %136 : vector<14x128xf32>
    %158 = arith.mulf %128, %134 : vector<14x128xf32>
    %159 = arith.subf %157, %158 : vector<14x128xf32>
    %160 = arith.addf %116, %159 : vector<14x128xf32>
    %161 = arith.mulf %130, %134 : vector<14x128xf32>
    %162 = arith.mulf %132, %136 : vector<14x128xf32>
    %163 = arith.addf %161, %162 : vector<14x128xf32>
    %164 = arith.addf %120, %163 : vector<14x128xf32>
    %165 = arith.mulf %130, %136 : vector<14x128xf32>
    %166 = arith.mulf %132, %134 : vector<14x128xf32>
    %167 = arith.subf %165, %166 : vector<14x128xf32>
    %168 = arith.addf %124, %167 : vector<14x128xf32>
    %169 = vector.broadcast %0 : f32 to vector<14x128xf32>
    %170 = arith.addf %140, %169 : vector<14x128xf32>
    %171 = vector.broadcast %0 : f32 to vector<14x128xf32>
    %172 = arith.addf %144, %171 : vector<14x128xf32>
    %173 = vector.broadcast %0 : f32 to vector<14x128xf32>
    %174 = arith.mulf %173, %172 : vector<14x128xf32>
    %175 = tpu.reciprocal %174 : vector<14x128xf32> -> vector<14x128xf32>
    %cst = arith.constant 2.82842708 : f32
    %176 = vector.broadcast %cst : f32 to vector<14x128xf32>
    %177 = arith.mulf %176, %175 : vector<14x128xf32>
    %178 = vector.broadcast %0 : f32 to vector<14x128xf32>
    %179 = arith.mulf %178, %170 : vector<14x128xf32>
    %180 = tpu.reciprocal %179 : vector<14x128xf32> -> vector<14x128xf32>
    %cst_85 = arith.constant 2.82842708 : f32
    %181 = vector.broadcast %cst_85 : f32 to vector<14x128xf32>
    %182 = arith.mulf %181, %180 : vector<14x128xf32>
    %183 = arith.mulf %172, %156 : vector<14x128xf32>
    %184 = arith.mulf %148, %164 : vector<14x128xf32>
    %185 = arith.mulf %152, %168 : vector<14x128xf32>
    %186 = arith.subf %184, %185 : vector<14x128xf32>
    %187 = arith.subf %183, %186 : vector<14x128xf32>
    %188 = arith.mulf %187, %177 : vector<14x128xf32>
    %c0_86 = arith.constant 0 : index
    %c0_87 = arith.constant 0 : index
    %c0_88 = arith.constant 0 : index
    %189 = vector.load %arg5[%c0_86, %c0_87, %c0_88] : memref<4x14x128xf32, #tpu.memory_space<vmem>>, vector<1x14x128xf32>
    %190 = vector.shape_cast %189 : vector<1x14x128xf32> to vector<14x128xf32>
    %191 = vector.shape_cast %188 : vector<14x128xf32> to vector<1x14x128xf32>
    tpu.vector_store %arg5[%c0_86, %c0_87, %c0_88], %191 {strides = array<i32>} : memref<4x14x128xf32, #tpu.memory_space<vmem>>, vector<1x14x128xf32>,
    %192 = arith.mulf %172, %160 : vector<14x128xf32>
    %193 = arith.mulf %148, %168 : vector<14x128xf32>
    %194 = arith.mulf %152, %164 : vector<14x128xf32>
    %195 = arith.addf %193, %194 : vector<14x128xf32>
    %196 = arith.subf %192, %195 : vector<14x128xf32>
    %197 = arith.mulf %196, %177 : vector<14x128xf32>
    %c1_89 = arith.constant 1 : index
    %c0_90 = arith.constant 0 : index
    %c0_91 = arith.constant 0 : index
    %198 = vector.load %arg5[%c1_89, %c0_90, %c0_91] : memref<4x14x128xf32, #tpu.memory_space<vmem>>, vector<1x14x128xf32>
    %199 = vector.shape_cast %198 : vector<1x14x128xf32> to vector<14x128xf32>
    %200 = vector.shape_cast %197 : vector<14x128xf32> to vector<1x14x128xf32>
    tpu.vector_store %arg5[%c1_89, %c0_90, %c0_91], %200 {strides = array<i32>} : memref<4x14x128xf32, #tpu.memory_space<vmem>>, vector<1x14x128xf32>,
    %201 = arith.mulf %170, %164 : vector<14x128xf32>
    %202 = arith.mulf %148, %156 : vector<14x128xf32>
    %203 = arith.mulf %152, %160 : vector<14x128xf32>
    %204 = arith.addf %202, %203 : vector<14x128xf32>
    %205 = arith.subf %201, %204 : vector<14x128xf32>
    %206 = arith.mulf %205, %182 : vector<14x128xf32>
    %c2_92 = arith.constant 2 : index
    %c0_93 = arith.constant 0 : index
    %c0_94 = arith.constant 0 : index
    %207 = vector.load %arg5[%c2_92, %c0_93, %c0_94] : memref<4x14x128xf32, #tpu.memory_space<vmem>>, vector<1x14x128xf32>
    %208 = vector.shape_cast %207 : vector<1x14x128xf32> to vector<14x128xf32>
    %209 = vector.shape_cast %206 : vector<14x128xf32> to vector<1x14x128xf32>
    tpu.vector_store %arg5[%c2_92, %c0_93, %c0_94], %209 {strides = array<i32>} : memref<4x14x128xf32, #tpu.memory_space<vmem>>, vector<1x14x128xf32>,
    %210 = arith.mulf %170, %168 : vector<14x128xf32>
    %211 = arith.mulf %148, %160 : vector<14x128xf32>
    %212 = arith.mulf %152, %156 : vector<14x128xf32>
    %213 = arith.subf %211, %212 : vector<14x128xf32>
    %214 = arith.subf %210, %213 : vector<14x128xf32>
    %215 = arith.mulf %214, %182 : vector<14x128xf32>
    %c3_95 = arith.constant 3 : index
    %c0_96 = arith.constant 0 : index
    %c0_97 = arith.constant 0 : index
    %216 = vector.load %arg5[%c3_95, %c0_96, %c0_97] : memref<4x14x128xf32, #tpu.memory_space<vmem>>, vector<1x14x128xf32>
    %217 = vector.shape_cast %216 : vector<1x14x128xf32> to vector<14x128xf32>
    %218 = vector.shape_cast %215 : vector<14x128xf32> to vector<1x14x128xf32>
    tpu.vector_store %arg5[%c3_95, %c0_96, %c0_97], %218 {strides = array<i32>} : memref<4x14x128xf32, #tpu.memory_space<vmem>>, vector<1x14x128xf32>,
    return
  }
}

</mosaic_0001>

<llo_original>
// kernel: custom-call
$region0: #{custom-call}
  %s0 = inlined_call_operand.hbm [shape: c64[2,1,4,1,2,14,64], index: 0, kind: input, shape index: {}]
  %s1 = inlined_call_operand.vmem [shape: f32[2,1,4,1,2,14,64], index: 1, kind: output, shape index: {}]
  $region1: #{custom-call} parent=0
    #allocation0 [shape = 's32[1]{0}', space=sflag, size = 0x4, scoped, tag = 'scoped memory for custom-call']
    %2 = vsyncpa [#allocation0], 0
    %s3 = sshll.u32 %s1, 4
    %s4 = int_to_ptr.vmem [resolvable:$true] %s3
    %6 = dma.hbm_to_vmem [thread:$0]  %s0, 3584, %s4, [#allocation0]
    %7 = dma.done [#allocation0], 3584
    %8 = vsyncpa [#allocation0], 1

// kernel: custom-call.1
$region0: #{custom-call.1}
  %s0 = inlined_call_operand.hbm [shape: c64[2,1,4,1,2,14,64], index: 0, kind: input, shape index: {}]
  %s1 = inlined_call_operand.vmem [shape: f32[2,1,4,1,2,14,64], index: 1, kind: output, shape index: {}]
  %s2 = scalar_lea.hbm %s0, 3584
  $region1: #{custom-call.1} parent=0
    #allocation0 [shape = 's32[1]{0}', space=sflag, size = 0x4, scoped, tag = 'scoped memory for custom-call.1']
    %3 = vsyncpa [#allocation0], 0
    %s4 = sshll.u32 %s1, 4
    %s5 = int_to_ptr.vmem [resolvable:$true] %s4
    %7 = dma.hbm_to_vmem [thread:$0]  %s2, 3584, %s5, [#allocation0]
    %8 = dma.done [#allocation0], 3584
    %9 = vsyncpa [#allocation0], 1

// kernel: custom-call.2
$region0: #{custom-call.2}
  %s0 = inlined_call_operand.hbm [shape: c64[2,1,4,14,64], index: 0, kind: input, shape index: {}]
  %s1 = inlined_call_operand.vmem [shape: f32[2,1,4,14,64], index: 1, kind: output, shape index: {}]
  $region1: #{custom-call.2} parent=0
    #allocation0 [shape = 's32[1]{0}', space=sflag, size = 0x4, scoped, tag = 'scoped memory for custom-call.2']
    %2 = vsyncpa [#allocation0], 0
    %s3 = sshll.u32 %s1, 4
    %s4 = int_to_ptr.vmem [resolvable:$true] %s3
    %6 = dma.hbm_to_vmem [thread:$0]  %s0, 1792, %s4, [#allocation0]
    %7 = dma.done [#allocation0], 1792
    %8 = vsyncpa [#allocation0], 1

// kernel: custom-call.3
$region0: #{custom-call.3}
  %s0 = inlined_call_operand.hbm [shape: c64[2,1,4,14,64], index: 0, kind: input, shape index: {}]
  %s1 = inlined_call_operand.vmem [shape: f32[2,1,4,14,64], index: 1, kind: output, shape index: {}]
  %s2 = scalar_lea.hbm %s0, 1792
  $region1: #{custom-call.3} parent=0
    #allocation0 [shape = 's32[1]{0}', space=sflag, size = 0x4, scoped, tag = 'scoped memory for custom-call.3']
    %3 = vsyncpa [#allocation0], 0
    %s4 = sshll.u32 %s1, 4
    %s5 = int_to_ptr.vmem [resolvable:$true] %s4
    %7 = dma.hbm_to_vmem [thread:$0]  %s2, 1792, %s5, [#allocation0]
    %8 = dma.done [#allocation0], 1792
    %9 = vsyncpa [#allocation0], 1

// kernel: pusch_receiver_forward.1
$region0: #{pusch_receiver_forward.1}
  #allocation0 [shape = 'u32[]', space=smem, size = 0x4, offset = 0x4, fixed_abs, tag = 'smem constant byte address 0x4 - core index']
  #allocation1 [shape = 'u32[144,128]{1,0:T(1,128)}', space=vmem, size = 0x12000, scoped, tag = 'internal scratch']
  #allocation2 [shape = 'f32[1]{0:T(128)S(6)}', space=smem, size = 0x200, scoped, tag = 'scoped memory for pusch_receiver_forward.1']
  %s0 = inlined_call_operand.<no memory space> [shape: f32[1], index: 0, kind: input, shape index: {}]
  %s1 = inlined_call_operand.vmem [shape: f32[2,4,14,128], index: 1, kind: input, shape index: {}]
  %s2 = inlined_call_operand.vmem [shape: f32[2,4,14,128], index: 2, kind: input, shape index: {}]
  %s3 = inlined_call_operand.vmem [shape: f32[4,14,128], index: 3, kind: input, shape index: {}]
  %s4 = inlined_call_operand.vmem [shape: f32[4,14,128], index: 4, kind: input, shape index: {}]
  %s5 = inlined_call_operand.vmem [shape: f32[4,14,128], index: 5, kind: output, shape index: {}]
  %s6 = sld [smem:[#allocation0]]
  $region30: #{pusch_receiver_forward.1} parent=0
    _
  %s8 = ssub.s32 1, %s6
  %s9 = scalar_select 0, %s8, %s6
  %10 = sst [smem:[#allocation2]] %s0
  // Predicated region
  $region2: #{pusch_receiver_forward.1} parent=0 // pred_check
    _
  $region3: #{pusch_receiver_forward.1} parent=0 // pred_check_branch
    %12 = sbr.rel (0) target = $region5
  $region4: #{pusch_receiver_forward.1} parent=0 // pred_region
    _
  $region5: #{pusch_receiver_forward.1} parent=0 // pred_fallthru
    _
  // Predicated region
  $region6: #{pusch_receiver_forward.1} parent=0 // pred_check
    _
  $region7: #{pusch_receiver_forward.1} parent=0 // pred_check_branch
    %14 = sbr.rel (0) target = $region9
  $region8: #{pusch_receiver_forward.1} parent=0 // pred_region
    _
  $region9: #{pusch_receiver_forward.1} parent=0 // pred_fallthru
    _
  // Predicated region
  $region10: #{pusch_receiver_forward.1} parent=0 // pred_check
    _
  $region11: #{pusch_receiver_forward.1} parent=0 // pred_check_branch
    %16 = sbr.rel (0) target = $region13
  $region12: #{pusch_receiver_forward.1} parent=0 // pred_region
    _
  $region13: #{pusch_receiver_forward.1} parent=0 // pred_fallthru
    _
  // Predicated region
  $region14: #{pusch_receiver_forward.1} parent=0 // pred_check
    _
  $region15: #{pusch_receiver_forward.1} parent=0 // pred_check_branch
    %18 = sbr.rel (0) target = $region17
  $region16: #{pusch_receiver_forward.1} parent=0 // pred_region
    _
  $region17: #{pusch_receiver_forward.1} parent=0 // pred_fallthru
    _
  // Predicated region
  $region18: #{pusch_receiver_forward.1} parent=0 // pred_check
    _
  $region19: #{pusch_receiver_forward.1} parent=0 // pred_check_branch
    %20 = sbr.rel (0) target = $region21
  $region20: #{pusch_receiver_forward.1} parent=0 // pred_region
    _
  $region21: #{pusch_receiver_forward.1} parent=0 // pred_fallthru
    _
  %s21 = sld [smem:[#allocation2]]
  %v22 = vld [vmem:[%s1] sm:$0xff]
  %v23 = vld [vmem:[%s1 + $0x8] sm:$0x3f]
  %v24 = vld [vmem:[%s2] sm:$0xff]
  %v25 = vld [vmem:[%s2 + $0x8] sm:$0x3f]
  %s26 = scalar_lea.vmem %s1, 64
  %v27 = vld [vmem:[%s26] sm:$0xff]
  %v28 = vld [vmem:[%s26 + $0x8] sm:$0x3f]
  %s29 = scalar_lea.vmem %s2, 64
  %v30 = vld [vmem:[%s29] sm:$0xff]
  %v31 = vld [vmem:[%s29 + $0x8] sm:$0x3f]
  %v32 = vld [vmem:[%s3] sm:$0xff]
  %v33 = vld [vmem:[%s3 + $0x8] sm:$0x3f]
  %v34 = vld [vmem:[%s4] sm:$0xff]
  %v35 = vld [vmem:[%s4 + $0x8] sm:$0x3f]
  %v36 = vmul.f32 %v22, %v22
  %v37 = vmul.f32 %v23, %v23
  %v38 = vmul.f32 %v24, %v24
  %v39 = vmul.f32 %v25, %v25
  %v40 = vadd.f32 %v36, %v38
  %v41 = vadd.f32 %v37, %v39
  %v42 = vmul.f32 %v27, %v27
  %v43 = vmul.f32 %v28, %v28
  %v44 = vmul.f32 %v30, %v30
  %v45 = vmul.f32 %v31, %v31
  %v46 = vadd.f32 %v42, %v44
  %v47 = vadd.f32 %v43, %v45
  %v48 = vmul.f32 %v22, %v27
  %v49 = vmul.f32 %v23, %v28
  %v50 = vmul.f32 %v24, %v30
  %v51 = vmul.f32 %v25, %v31
  %v52 = vadd.f32 %v48, %v50
  %v53 = vadd.f32 %v49, %v51
  %v54 = vmul.f32 %v22, %v30
  %v55 = vmul.f32 %v23, %v31
  %v56 = vmul.f32 %v24, %v27
  %v57 = vmul.f32 %v25, %v28
  %v58 = vsub.f32 %v54, %v56
  %v59 = vsub.f32 %v55, %v57
  %v60 = vmul.f32 %v22, %v32
  %v61 = vmul.f32 %v23, %v33
  %v62 = vmul.f32 %v24, %v34
  %v63 = vmul.f32 %v25, %v35
  %v64 = vadd.f32 %v60, %v62
  %v65 = vadd.f32 %v61, %v63
  %v66 = vmul.f32 %v22, %v34
  %v67 = vmul.f32 %v23, %v35
  %v68 = vmul.f32 %v24, %v32
  %v69 = vmul.f32 %v25, %v33
  %v70 = vsub.f32 %v66, %v68
  %v71 = vsub.f32 %v67, %v69
  %v72 = vmul.f32 %v27, %v32
  %v73 = vmul.f32 %v28, %v33
  %v74 = vmul.f32 %v30, %v34
  %v75 = vmul.f32 %v31, %v35
  %v76 = vadd.f32 %v72, %v74
  %v77 = vadd.f32 %v73, %v75
  %v78 = vmul.f32 %v27, %v34
  %v79 = vmul.f32 %v28, %v35
  %v80 = vmul.f32 %v30, %v32
  %v81 = vmul.f32 %v31, %v33
  %v82 = vsub.f32 %v78, %v80
  %v83 = vsub.f32 %v79, %v81
  %s84 = scalar_lea.vmem %s1, 16
  %v85 = vld [vmem:[%s84] sm:$0xff]
  %v86 = vld [vmem:[%s84 + $0x8] sm:$0x3f]
  %s87 = scalar_lea.vmem %s2, 16
  %v88 = vld [vmem:[%s87] sm:$0xff]
  %v89 = vld [vmem:[%s87 + $0x8] sm:$0x3f]
  %s90 = scalar_lea.vmem %s1, 80
  %v91 = vld [vmem:[%s90] sm:$0xff]
  %v92 = vld [vmem:[%s90 + $0x8] sm:$0x3f]
  %s93 = scalar_lea.vmem %s2, 80
  %v94 = vld [vmem:[%s93] sm:$0xff]
  %v95 = vld [vmem:[%s93 + $0x8] sm:$0x3f]
  %s96 = scalar_lea.vmem %s3, 16
  %v97 = vld [vmem:[%s96] sm:$0xff]
  %v98 = vld [vmem:[%s96 + $0x8] sm:$0x3f]
  %s99 = scalar_lea.vmem %s4, 16
  %v100 = vld [vmem:[%s99] sm:$0xff]
  %v101 = vld [vmem:[%s99 + $0x8] sm:$0x3f]
  %v102 = vmul.f32 %v85, %v85
  %v103 = vmul.f32 %v86, %v86
  %v104 = vmul.f32 %v88, %v88
  %v105 = vmul.f32 %v89, %v89
  %v106 = vadd.f32 %v102, %v104
  %v107 = vadd.f32 %v103, %v105
  %v108 = vadd.f32 %v40, %v106
  %v109 = vadd.f32 %v41, %v107
  %v110 = vmul.f32 %v91, %v91
  %v111 = vmul.f32 %v92, %v92
  %v112 = vmul.f32 %v94, %v94
  %v113 = vmul.f32 %v95, %v95
  %v114 = vadd.f32 %v110, %v112
  %v115 = vadd.f32 %v111, %v113
  %v116 = vadd.f32 %v46, %v114
  %v117 = vadd.f32 %v47, %v115
  %v118 = vmul.f32 %v85, %v91
  %v119 = vmul.f32 %v86, %v92
  %v120 = vmul.f32 %v88, %v94
  %v121 = vmul.f32 %v89, %v95
  %v122 = vadd.f32 %v118, %v120
  %v123 = vadd.f32 %v119, %v121
  %v124 = vadd.f32 %v52, %v122
  %v125 = vadd.f32 %v53, %v123
  %v126 = vmul.f32 %v85, %v94
  %v127 = vmul.f32 %v86, %v95
  %v128 = vmul.f32 %v88, %v91
  %v129 = vmul.f32 %v89, %v92
  %v130 = vsub.f32 %v126, %v128
  %v131 = vsub.f32 %v127, %v129
  %v132 = vadd.f32 %v58, %v130
  %v133 = vadd.f32 %v59, %v131
  %v134 = vmul.f32 %v85, %v97
  %v135 = vmul.f32 %v86, %v98
  %v136 = vmul.f32 %v88, %v100
  %v137 = vmul.f32 %v89, %v101
  %v138 = vadd.f32 %v134, %v136
  %v139 = vadd.f32 %v135, %v137
  %v140 = vadd.f32 %v64, %v138
  %v141 = vadd.f32 %v65, %v139
  %v142 = vmul.f32 %v85, %v100
  %v143 = vmul.f32 %v86, %v101
  %v144 = vmul.f32 %v88, %v97
  %v145 = vmul.f32 %v89, %v98
  %v146 = vsub.f32 %v142, %v144
  %v147 = vsub.f32 %v143, %v145
  %v148 = vadd.f32 %v70, %v146
  %v149 = vadd.f32 %v71, %v147
  %v150 = vmul.f32 %v91, %v97
  %v151 = vmul.f32 %v92, %v98
  %v152 = vmul.f32 %v94, %v100
  %v153 = vmul.f32 %v95, %v101
  %v154 = vadd.f32 %v150, %v152
  %v155 = vadd.f32 %v151, %v153
  %v156 = vadd.f32 %v76, %v154
  %v157 = vadd.f32 %v77, %v155
  %v158 = vmul.f32 %v91, %v100
  %v159 = vmul.f32 %v92, %v101
  %v160 = vmul.f32 %v94, %v97
  %v161 = vmul.f32 %v95, %v98
  %v162 = vsub.f32 %v158, %v160
  %v163 = vsub.f32 %v159, %v161
  %v164 = vadd.f32 %v82, %v162
  %v165 = vadd.f32 %v83, %v163
  %s166 = scalar_lea.vmem %s1, 32
  %v167 = vld [vmem:[%s166] sm:$0xff]
  %v168 = vld [vmem:[%s166 + $0x8] sm:$0x3f]
  %s169 = scalar_lea.vmem %s2, 32
  %v170 = vld [vmem:[%s169] sm:$0xff]
  %v171 = vld [vmem:[%s169 + $0x8] sm:$0x3f]
  %s172 = scalar_lea.vmem %s1, 96
  %v173 = vld [vmem:[%s172] sm:$0xff]
  %v174 = vld [vmem:[%s172 + $0x8] sm:$0x3f]
  %s175 = scalar_lea.vmem %s2, 96
  %v176 = vld [vmem:[%s175] sm:$0xff]
  %v177 = vld [vmem:[%s175 + $0x8] sm:$0x3f]
  %s178 = scalar_lea.vmem %s3, 32
  %v179 = vld [vmem:[%s178] sm:$0xff]
  %v180 = vld [vmem:[%s178 + $0x8] sm:$0x3f]
  %s181 = scalar_lea.vmem %s4, 32
  %v182 = vld [vmem:[%s181] sm:$0xff]
  %v183 = vld [vmem:[%s181 + $0x8] sm:$0x3f]
  %v184 = vmul.f32 %v167, %v167
  %v185 = vmul.f32 %v168, %v168
  %v186 = vmul.f32 %v170, %v170
  %v187 = vmul.f32 %v171, %v171
  %v188 = vadd.f32 %v184, %v186
  %v189 = vadd.f32 %v185, %v187
  %v190 = vadd.f32 %v108, %v188
  %v191 = vadd.f32 %v109, %v189
  %v192 = vmul.f32 %v173, %v173
  %v193 = vmul.f32 %v174, %v174
  %v194 = vmul.f32 %v176, %v176
  %v195 = vmul.f32 %v177, %v177
  %v196 = vadd.f32 %v192, %v194
  %v197 = vadd.f32 %v193, %v195
  %v198 = vadd.f32 %v116, %v196
  %v199 = vadd.f32 %v117, %v197
  %v200 = vmul.f32 %v167, %v173
  %v201 = vmul.f32 %v168, %v174
  %v202 = vmul.f32 %v170, %v176
  %v203 = vmul.f32 %v171, %v177
  %v204 = vadd.f32 %v200, %v202
  %v205 = vadd.f32 %v201, %v203
  %v206 = vadd.f32 %v124, %v204
  %v207 = vadd.f32 %v125, %v205
  %v208 = vmul.f32 %v167, %v176
  %v209 = vmul.f32 %v168, %v177
  %v210 = vmul.f32 %v170, %v173
  %v211 = vmul.f32 %v171, %v174
  %v212 = vsub.f32 %v208, %v210
  %v213 = vsub.f32 %v209, %v211
  %v214 = vadd.f32 %v132, %v212
  %v215 = vadd.f32 %v133, %v213
  %v216 = vmul.f32 %v167, %v179
  %v217 = vmul.f32 %v168, %v180
  %v218 = vmul.f32 %v170, %v182
  %v219 = vmul.f32 %v171, %v183
  %v220 = vadd.f32 %v216, %v218
  %v221 = vadd.f32 %v217, %v219
  %v222 = vadd.f32 %v140, %v220
  %v223 = vadd.f32 %v141, %v221
  %v224 = vmul.f32 %v167, %v182
  %v225 = vmul.f32 %v168, %v183
  %v226 = vmul.f32 %v170, %v179
  %v227 = vmul.f32 %v171, %v180
  %v228 = vsub.f32 %v224, %v226
  %v229 = vsub.f32 %v225, %v227
  %v230 = vadd.f32 %v148, %v228
  %v231 = vadd.f32 %v149, %v229
  %v232 = vmul.f32 %v173, %v179
  %v233 = vmul.f32 %v174, %v180
  %v234 = vmul.f32 %v176, %v182
  %v235 = vmul.f32 %v177, %v183
  %v236 = vadd.f32 %v232, %v234
  %v237 = vadd.f32 %v233, %v235
  %v238 = vadd.f32 %v156, %v236
  %v239 = vadd.f32 %v157, %v237
  %v240 = vmul.f32 %v173, %v182
  %v241 = vmul.f32 %v174, %v183
  %v242 = vmul.f32 %v176, %v179
  %v243 = vmul.f32 %v177, %v180
  %v244 = vsub.f32 %v240, %v242
  %v245 = vsub.f32 %v241, %v243
  %v246 = vadd.f32 %v164, %v244
  %v247 = vadd.f32 %v165, %v245
  %s248 = scalar_lea.vmem %s1, 48
  %v249 = vld [vmem:[%s248] sm:$0xff]
  %v250 = vld [vmem:[%s248 + $0x8] sm:$0x3f]
  %s251 = scalar_lea.vmem %s2, 48
  %v252 = vld [vmem:[%s251] sm:$0xff]
  %v253 = vld [vmem:[%s251 + $0x8] sm:$0x3f]
  %s254 = scalar_lea.vmem %s1, 112
  %v255 = vld [vmem:[%s254] sm:$0xff]
  %v256 = vld [vmem:[%s254 + $0x8] sm:$0x3f]
  %s257 = scalar_lea.vmem %s2, 112
  %v258 = vld [vmem:[%s257] sm:$0xff]
  %v259 = vld [vmem:[%s257 + $0x8] sm:$0x3f]
  %s260 = scalar_lea.vmem %s3, 48
  %v261 = vld [vmem:[%s260] sm:$0xff]
  %v262 = vld [vmem:[%s260 + $0x8] sm:$0x3f]
  %s263 = scalar_lea.vmem %s4, 48
  %v264 = vld [vmem:[%s263] sm:$0xff]
  %v265 = vld [vmem:[%s263 + $0x8] sm:$0x3f]
  %v266 = vmul.f32 %v249, %v249
  %v267 = vmul.f32 %v250, %v250
  %v268 = vmul.f32 %v252, %v252
  %v269 = vmul.f32 %v253, %v253
  %v270 = vadd.f32 %v266, %v268
  %v271 = vadd.f32 %v267, %v269
  %v272 = vadd.f32 %v190, %v270
  %v273 = vadd.f32 %v191, %v271
  %v274 = vmul.f32 %v255, %v255
  %v275 = vmul.f32 %v256, %v256
  %v276 = vmul.f32 %v258, %v258
  %v277 = vmul.f32 %v259, %v259
  %v278 = vadd.f32 %v274, %v276
  %v279 = vadd.f32 %v275, %v277
  %v280 = vadd.f32 %v198, %v278
  %v281 = vadd.f32 %v199, %v279
  %v282 = vmul.f32 %v249, %v255
  %v283 = vmul.f32 %v250, %v256
  %v284 = vmul.f32 %v252, %v258
  %v285 = vmul.f32 %v253, %v259
  %v286 = vadd.f32 %v282, %v284
  %v287 = vadd.f32 %v283, %v285
  %v288 = vadd.f32 %v206, %v286
  %v289 = vadd.f32 %v207, %v287
  %v290 = vmul.f32 %v249, %v258
  %v291 = vmul.f32 %v250, %v259
  %v292 = vmul.f32 %v252, %v255
  %v293 = vmul.f32 %v253, %v256
  %v294 = vsub.f32 %v290, %v292
  %v295 = vsub.f32 %v291, %v293
  %v296 = vadd.f32 %v214, %v294
  %v297 = vadd.f32 %v215, %v295
  %v298 = vmul.f32 %v249, %v261
  %v299 = vmul.f32 %v250, %v262
  %v300 = vmul.f32 %v252, %v264
  %v301 = vmul.f32 %v253, %v265
  %v302 = vadd.f32 %v298, %v300
  %v303 = vadd.f32 %v299, %v301
  %v304 = vadd.f32 %v222, %v302
  %v305 = vadd.f32 %v223, %v303
  %v306 = vmul.f32 %v249, %v264
  %v307 = vmul.f32 %v250, %v265
  %v308 = vmul.f32 %v252, %v261
  %v309 = vmul.f32 %v253, %v262
  %v310 = vsub.f32 %v306, %v308
  %v311 = vsub.f32 %v307, %v309
  %v312 = vadd.f32 %v230, %v310
  %v313 = vadd.f32 %v231, %v311
  %v314 = vmul.f32 %v255, %v261
  %v315 = vmul.f32 %v256, %v262
  %v316 = vmul.f32 %v258, %v264
  %v317 = vmul.f32 %v259, %v265
  %v318 = vadd.f32 %v314, %v316
  %v319 = vadd.f32 %v315, %v317
  %v320 = vadd.f32 %v238, %v318
  %v321 = vadd.f32 %v239, %v319
  %v322 = vmul.f32 %v255, %v264
  %v323 = vmul.f32 %v256, %v265
  %v324 = vmul.f32 %v258, %v261
  %v325 = vmul.f32 %v259, %v262
  %v326 = vsub.f32 %v322, %v324
  %v327 = vsub.f32 %v323, %v325
  %v328 = vadd.f32 %v246, %v326
  %v329 = vadd.f32 %v247, %v327
  %v330 = vstv %s21
  %v331 = vadd.f32 %v272, %v330
  %v332 = vadd.f32 %v273, %v330
  %v333 = vadd.f32 %v280, %v330
  %v334 = vadd.f32 %v281, %v330
  %v335 = vmul.f32 %v330, %v333
  %v336 = vmul.f32 %v330, %v334
  %v337 = vrcp.pop %v335
  %v338 = vrcp.pop %v336
  %v339 = vmul.f32 %v337, 2.828427
  %v340 = vmul.f32 %v338, 2.828427
  %v341 = vmul.f32 %v330, %v331
  %v342 = vmul.f32 %v330, %v332
  %v343 = vrcp.pop %v341
  %v344 = vrcp.pop %v342
  %v345 = vmul.f32 %v343, 2.828427
  %v346 = vmul.f32 %v344, 2.828427
  %v347 = vmul.f32 %v333, %v304
  %v348 = vmul.f32 %v334, %v305
  %v349 = vmul.f32 %v288, %v320
  %v350 = vmul.f32 %v289, %v321
  %v351 = vmul.f32 %v296, %v328
  %v352 = vmul.f32 %v297, %v329
  %v353 = vsub.f32 %v349, %v351
  %v354 = vsub.f32 %v350, %v352
  %v355 = vsub.f32 %v347, %v353
  %v356 = vsub.f32 %v348, %v354
  %v357 = vmul.f32 %v355, %v339
  %v358 = vmul.f32 %v356, %v340
  %359 = vst [vmem:[%s5] sm:$0xff] %v357
  %360 = vst [vmem:[%s5 + $0x8] sm:$0x3f] %v358
  %v361 = vmul.f32 %v333, %v312
  %v362 = vmul.f32 %v334, %v313
  %v363 = vmul.f32 %v288, %v328
  %v364 = vmul.f32 %v289, %v329
  %v365 = vmul.f32 %v296, %v320
  %v366 = vmul.f32 %v297, %v321
  %v367 = vadd.f32 %v363, %v365
  %v368 = vadd.f32 %v364, %v366
  %v369 = vsub.f32 %v361, %v367
  %v370 = vsub.f32 %v362, %v368
  %v371 = vmul.f32 %v369, %v339
  %v372 = vmul.f32 %v370, %v340
  %s373 = scalar_lea.vmem %s5, 16
  %374 = vst [vmem:[%s373] sm:$0xff] %v371
  %375 = vst [vmem:[%s373 + $0x8] sm:$0x3f] %v372
  %v376 = vmul.f32 %v331, %v320
  %v377 = vmul.f32 %v332, %v321
  %v378 = vmul.f32 %v288, %v304
  %v379 = vmul.f32 %v289, %v305
  %v380 = vmul.f32 %v296, %v312
  %v381 = vmul.f32 %v297, %v313
  %v382 = vadd.f32 %v378, %v380
  %v383 = vadd.f32 %v379, %v381
  %v384 = vsub.f32 %v376, %v382
  %v385 = vsub.f32 %v377, %v383
  %v386 = vmul.f32 %v384, %v345
  %v387 = vmul.f32 %v385, %v346
  %s388 = scalar_lea.vmem %s5, 32
  %389 = vst [vmem:[%s388] sm:$0xff] %v386
  %390 = vst [vmem:[%s388 + $0x8] sm:$0x3f] %v387
  %v391 = vmul.f32 %v331, %v328
  %v392 = vmul.f32 %v332, %v329
  %v393 = vmul.f32 %v288, %v312
  %v394 = vmul.f32 %v289, %v313
  %v395 = vmul.f32 %v296, %v304
  %v396 = vmul.f32 %v297, %v305
  %v397 = vsub.f32 %v393, %v395
  %v398 = vsub.f32 %v394, %v396
  %v399 = vsub.f32 %v391, %v397
  %v400 = vsub.f32 %v392, %v398
  %v401 = vmul.f32 %v399, %v345
  %v402 = vmul.f32 %v400, %v346
  %s403 = scalar_lea.vmem %s5, 48
  %404 = vst [vmem:[%s403] sm:$0xff] %v401
  %405 = vst [vmem:[%s403 + $0x8] sm:$0x3f] %v402
  // Predicated region
  $region22: #{pusch_receiver_forward.1} parent=0 // pred_check
    _
  $region23: #{pusch_receiver_forward.1} parent=0 // pred_check_branch
    %407 = sbr.rel (0) target = $region25
  $region24: #{pusch_receiver_forward.1} parent=0 // pred_region
    _
  $region25: #{pusch_receiver_forward.1} parent=0 // pred_fallthru
    _
  // Predicated region
  $region26: #{pusch_receiver_forward.1} parent=0 // pred_check
    _
  $region27: #{pusch_receiver_forward.1} parent=0 // pred_check_branch
    %409 = sbr.rel (0) target = $region29
  $region28: #{pusch_receiver_forward.1} parent=0 // pred_region
    _
  $region29: #{pusch_receiver_forward.1} parent=0 // pred_fallthru
    _

</llo_original>
